<compile_context>
chip_gen: v7x
topology: tpu7x:2x2x1
jax: 0.10.0
libtpu: 0.0.40
codegen_flags: <defaults>
</compile_context>

<pallas_src>
import functools

import jax
import jax.numpy as jnp
from jax.experimental import pallas as pl
from jax.experimental.pallas import tpu as pltpu

GAMMA = 2.0          # exponent hard-coded as an explicit square (VALU, no pow)
ALPHA = 0.25

_VMEM_LIMIT = 48 * 1024 * 1024      # scoped VMEM; fits v7x's 64 MiB, roomy on v5e/v6e
_MAX_TILE_BYTES = 2 * 1024 * 1024   # per-input tile (x2 inputs x2 pipeline buffers = 8 MiB)


def _largest_divisor_leq(n, cap):
    """Largest divisor of n that is <= cap (>= 1)."""
    cap = max(1, min(n, cap))
    for d in range(cap, 0, -1):
        if n % d == 0:
            return d
    return 1


def _store_partial(out_ref, elem):
    """Reduce a tile to its total and write it into element [0,0] of the (8,128)
    output block (zeros elsewhere), so the host-side jnp.sum of partials is exact.
    Only single-axis reductions are used (sublane adds, one XLU lane reduce)."""
    total = elem
    while total.ndim > 2:
        total = jnp.sum(total, axis=0)                     # collapse leading dims
    total = jnp.sum(total, axis=0, keepdims=True)          # (1, L)  sublane reduce
    total = jnp.sum(total, axis=1, keepdims=True)          # (1, 1)  lane reduce (XLU)
    rows = jax.lax.broadcasted_iota(jnp.int32, (8, 128), 0)
    cols = jax.lax.broadcasted_iota(jnp.int32, (8, 128), 1)
    out_ref[...] = jnp.where((rows == 0) & (cols == 0),
                             jnp.broadcast_to(total, (8, 128)), 0.0)


def _focal_terms(x, t, class_axis, valid):
    """Elementwise t*log_softmax(x) and alpha_t*(1-p_t)^2 for one tile (f32)."""
    if valid is not None:
        # Zero out-of-bounds garbage so exp/log stay finite; t==0 there also
        # makes the CE term vanish without an extra mask.
        x = jnp.where(valid, x, 0.0)
        t = jnp.where(valid, t, 0.0)

    m = jnp.max(x, axis=class_axis, keepdims=True)
    xm = x - m
    e = jnp.exp(xm)
    s = jnp.sum(e, axis=class_axis, keepdims=True)
    p = e * pl.reciprocal(s, approx=True)        # EUP reciprocal: frees VALU slots
    tlp = t * (xm - jnp.log(s))                  # t * log_softmax(x)

    # Fused focal-weight algebra (gamma == 2):
    #   1 - p_t = p + t - 2*p*t ;   alpha_t = (1-ALPHA) - (1-2*ALPHA)*t
    d = p + t - 2.0 * (p * t)
    alpha_t = (1.0 - ALPHA) - (1.0 - 2.0 * ALPHA) * t
    w = alpha_t * (d * d)
    if valid is not None:
        w = jnp.where(valid, w, 0.0)             # t==0 does NOT zero w -> must mask
    return tlp, w


def _focal_2d_kernel(x_ref, t_ref, tlp_ref, w_ref, *, n_rows, tile_rows, need_mask):
    """[R, C] layout: class on the lane axis, grid over row tiles."""
    x = x_ref[...].astype(jnp.float32)
    t = t_ref[...].astype(jnp.float32)
    valid = None
    if need_mask:
        rows = (pl.program_id(0) * tile_rows
                + jax.lax.broadcasted_iota(jnp.int32, x.shape, 0))
        valid = rows < n_rows
    tlp, w = _focal_terms(x, t, class_axis=-1, valid=valid)
    _store_partial(tlp_ref, tlp)
    _store_partial(w_ref, w)


def _focal_nchw_kernel(x_ref, t_ref, tlp_ref, w_ref, *, hw, tile_hw, need_mask):
    """[N, C, H*W] layout: class on sublanes, spatial on lanes; nb batches/step."""
    x = x_ref[...].astype(jnp.float32)           # (nb, C, tile_hw)
    t = t_ref[...].astype(jnp.float32)
    valid = None
    if need_mask:
        cols = (pl.program_id(1) * tile_hw
                + jax.lax.broadcasted_iota(jnp.int32, x.shape, 2))
        valid = cols < hw
    tlp, w = _focal_terms(x, t, class_axis=1, valid=valid)
    _store_partial(tlp_ref, tlp)
    _store_partial(w_ref, w)


def focal_loss(x, target, *, reduce="mean", max_tile_bytes=_MAX_TILE_BYTES):
    """x, target: same shape, either [N, C] or NCHW [N, C, H, W] (class axis = 1)."""
    if x.ndim == 4:
        n, c, h, w_sp = x.shape
        hw = h * w_sp
        x_in = x.reshape(n, c, hw)               # free reshape, no transpose
        t_in = target.reshape(n, c, hw)

        plane_bytes = 4 * c * hw                 # one batch element, f32 budget
        if plane_bytes <= max_tile_bytes:
            tile_hw = hw                         # full spatial extent
            nb = _largest_divisor_leq(n, max_tile_bytes // plane_bytes)
        else:
            nb = 1
            tile_hw = max(128, (max_tile_bytes // (4 * c) // 128) * 128)
            tile_hw = min(tile_hw, hw)

        g0 = n // nb
        g1 = pl.cdiv(hw, tile_hw)
        grid = (g0, g1)
        need_mask = (hw % tile_hw) != 0
        kernel = functools.partial(_focal_nchw_kernel, hw=hw, tile_hw=tile_hw,
                                   need_mask=need_mask)
        in_spec = pl.BlockSpec((nb, c, tile_hw), lambda b, j: (b, 0, j))
        part_shape = (g0 * 8, g1 * 128)
        out_spec = pl.BlockSpec((8, 128), lambda b, j: (b, j))
        dims = ("parallel", "parallel")
        n_ce = n * hw                            # CrossEntropyLoss averages over positions
        n_elems = n * c * hw
    elif x.ndim == 2:
        r, c = x.shape
        x_in, t_in = x, target
        row_budget = max(8, max_tile_bytes // (4 * c))
        if r <= row_budget:
            tile_rows = r                        # single full-extent block (any r)
        else:
            tile_rows = max(8, (row_budget // 8) * 8)
        g0 = pl.cdiv(r, tile_rows)
        grid = (g0,)
        need_mask = (r % tile_rows) != 0
        kernel = functools.partial(_focal_2d_kernel, n_rows=r, tile_rows=tile_rows,
                                   need_mask=need_mask)
        in_spec = pl.BlockSpec((tile_rows, c), lambda i: (i, 0))
        part_shape = (g0 * 8, 128)
        out_spec = pl.BlockSpec((8, 128), lambda i: (i, 0))
        dims = ("parallel",)
        n_ce = r
        n_elems = r * c
    else:
        raise ValueError("expected 2-D [N,C] or 4-D NCHW input")

    tlp_parts, w_parts = pl.pallas_call(
        kernel,
        out_shape=(jax.ShapeDtypeStruct(part_shape, jnp.float32),
                   jax.ShapeDtypeStruct(part_shape, jnp.float32)),
        grid_spec=pltpu.PrefetchScalarGridSpec(
            num_scalar_prefetch=0,
            grid=grid,
            in_specs=[in_spec, in_spec],
            out_specs=[out_spec, out_spec],
        ),
        compiler_params=pltpu.CompilerParams(
            dimension_semantics=dims,
            vmem_limit_bytes=_VMEM_LIMIT),
    )(x_in, t_in)

    # Tiny final reduction + the scalar FocalLoss formula in plain JAX.
    ce_mean = -jnp.sum(tlp_parts) / jnp.float32(n_ce)    # CrossEntropyLoss scalar
    w_sum = jnp.sum(w_parts)                             # sum of alpha_t*(1-p_t)^2
    if reduce == "mean":
        return ce_mean * (w_sum / jnp.float32(n_elems))
    return ce_mean * w_sum


def focal_loss_ref(x, target, gamma=GAMMA, alpha=ALPHA, reduce="mean"):
    """Pure-JAX reference mirroring the PyTorch module."""
    logp = jax.nn.log_softmax(x, axis=1)
    p = jnp.exp(logp)
    p_t = p * target + (1.0 - p) * (1.0 - target)
    ce = jnp.mean(-jnp.sum(target * logp, axis=1))       # CrossEntropyLoss scalar
    alpha_t = alpha * target + (1.0 - alpha) * (1.0 - target)
    loss = alpha_t * (1.0 - p_t) ** gamma * ce
    return loss.mean() if reduce == "mean" else loss.sum()


if __name__ == "__main__":
    key = jax.random.PRNGKey(0)
    k1, k2, k3, k4, k5, k6 = jax.random.split(key, 6)

    # Case 1: classification logits [N, C] (class on lanes, single full tile).
    N, C = 32, 128
    x2d = jax.random.normal(k1, (N, C), dtype=jnp.float32)
    t2d = jax.nn.one_hot(jax.random.randint(k2, (N,), 0, C), C, dtype=jnp.float32)
    out2d = focal_loss(x2d, t2d)
    jax.block_until_ready(out2d)
    ref2d = focal_loss_ref(x2d, t2d)
    assert jnp.allclose(out2d, ref2d, rtol=1e-3, atol=1e-6), (out2d, ref2d)

    out2d_sum = focal_loss(x2d, t2d, reduce="sum")
    ref2d_sum = focal_loss_ref(x2d, t2d, reduce="sum")
    assert jnp.allclose(out2d_sum, ref2d_sum, rtol=1e-3, atol=1e-3), (out2d_sum, ref2d_sum)

    # Case 2: NCHW segmentation-style input [2, 4, 16, 16]
    # (class on sublanes, both batch elements packed into one grid step).
    x4d = jax.random.normal(k3, (2, 4, 16, 16), dtype=jnp.float32)
    lab4d = jax.random.randint(k4, (2, 16, 16), 0, 4)
    t4d = jnp.transpose(jax.nn.one_hot(lab4d, 4, dtype=jnp.float32), (0, 3, 1, 2))
    out4d = focal_loss(x4d, t4d)
    jax.block_until_ready(out4d)
    ref4d = focal_loss_ref(x4d, t4d)
    assert jnp.allclose(out4d, ref4d, rtol=1e-3, atol=1e-6), (out4d, ref4d)

    # Case 3: force row tiling + ragged last tile on the 2-D path (mask path).
    x2r = jax.random.normal(k5, (50, 128), dtype=jnp.float32)
    t2r = jax.nn.one_hot(jax.random.randint(k6, (50,), 0, 128), 128, dtype=jnp.float32)
    out2r = focal_loss(x2r, t2r, max_tile_bytes=8 * 128 * 4)
    jax.block_until_ready(out2r)
    ref2r = focal_loss_ref(x2r, t2r)
    assert jnp.allclose(out2r, ref2r, rtol=1e-3, atol=1e-6), (out2r, ref2r)

    # Case 4: force spatial tiling + ragged last tile on the NCHW path (mask path).
    x4r = jax.random.normal(k1, (2, 4, 10, 30), dtype=jnp.float32)
    labr = jax.random.randint(k2, (2, 10, 30), 0, 4)
    t4r = jnp.transpose(jax.nn.one_hot(labr, 4, dtype=jnp.float32), (0, 3, 1, 2))
    out4r = focal_loss(x4r, t4r, max_tile_bytes=2048)
    jax.block_until_ready(out4r)
    ref4r = focal_loss_ref(x4r, t4r)
    assert jnp.allclose(out4r, ref4r, rtol=1e-3, atol=1e-6), (out4r, ref4r)

    print("KERNEL_OK")
</pallas_src>

<mosaic_0001>
module attributes {stable_mosaic.version = 11 : i64} {
  func.func @_focal_2d_kernel(%arg0: i32, %arg1: memref<32x128xf32, #tpu.memory_space<vmem>>, %arg2: memref<32x128xf32, #tpu.memory_space<vmem>>, %arg3: memref<8x128xf32, #tpu.memory_space<vmem>>, %arg4: memref<8x128xf32, #tpu.memory_space<vmem>>) attributes {dimension_semantics = [#tpu.dimension_semantics<parallel>], iteration_bounds = array<i64: 1>, scalar_prefetch = 0 : i64, scratch_operands = 0 : i64, tpu.core_type = #tpu.core_type<tc>, window_params = [{transform_indices = @transform_0, window_bounds = array<i64: 32, 128>}, {transform_indices = @transform_1, window_bounds = array<i64: 32, 128>}, {transform_indices = @transform_2, window_bounds = array<i64: 8, 128>}, {transform_indices = @transform_3, window_bounds = array<i64: 8, 128>}]} {
    %c0 = arith.constant 0 : index
    %c0_0 = arith.constant 0 : index
    %0 = vector.load %arg1[%c0, %c0_0] : memref<32x128xf32, #tpu.memory_space<vmem>>, vector<32x128xf32>
    %c0_1 = arith.constant 0 : index
    %c0_2 = arith.constant 0 : index
    %1 = vector.load %arg2[%c0_1, %c0_2] : memref<32x128xf32, #tpu.memory_space<vmem>>, vector<32x128xf32>
    %cst = arith.constant dense<0xFF800000> : vector<32xf32>
    %2 = vector.multi_reduction <maximumf>, %0, %cst [1] : vector<32x128xf32> to vector<32xf32>
    %3 = vector.shape_cast %2 : vector<32xf32> to vector<32x1xf32>
    %4 = vector.broadcast %3 : vector<32x1xf32> to vector<32x128xf32>
    %5 = arith.subf %0, %4 : vector<32x128xf32>
    %6 = math.exp %5 : vector<32x128xf32>
    %cst_3 = arith.constant dense<0.000000e+00> : vector<32xf32>
    %7 = vector.multi_reduction <add>, %6, %cst_3 [1] : vector<32x128xf32> to vector<32xf32>
    %8 = vector.shape_cast %7 : vector<32xf32> to vector<32x1xf32>
    %9 = tpu.reciprocal %8 {approx = true} : vector<32x1xf32> -> vector<32x1xf32>
    %10 = vector.broadcast %9 : vector<32x1xf32> to vector<32x128xf32>
    %11 = arith.mulf %6, %10 : vector<32x128xf32>
    %12 = math.log %8 : vector<32x1xf32>
    %13 = vector.broadcast %12 : vector<32x1xf32> to vector<32x128xf32>
    %14 = arith.subf %5, %13 : vector<32x128xf32>
    %15 = arith.mulf %1, %14 : vector<32x128xf32>
    %16 = arith.addf %11, %1 : vector<32x128xf32>
    %17 = arith.mulf %11, %1 : vector<32x128xf32>
    %cst_4 = arith.constant 2.000000e+00 : f32
    %18 = vector.broadcast %cst_4 : f32 to vector<32x128xf32>
    %19 = arith.mulf %18, %17 : vector<32x128xf32>
    %20 = arith.subf %16, %19 : vector<32x128xf32>
    %cst_5 = arith.constant 5.000000e-01 : f32
    %21 = vector.broadcast %cst_5 : f32 to vector<32x128xf32>
    %22 = arith.mulf %21, %1 : vector<32x128xf32>
    %cst_6 = arith.constant 7.500000e-01 : f32
    %23 = vector.broadcast %cst_6 : f32 to vector<32x128xf32>
    %24 = arith.subf %23, %22 : vector<32x128xf32>
    %25 = arith.mulf %20, %20 : vector<32x128xf32>
    %26 = arith.mulf %24, %25 : vector<32x128xf32>
    %cst_7 = arith.constant dense<0.000000e+00> : vector<128xf32>
    %27 = vector.multi_reduction <add>, %15, %cst_7 [0] : vector<32x128xf32> to vector<128xf32>
    %28 = vector.shape_cast %27 : vector<128xf32> to vector<1x128xf32>
    %cst_8 = arith.constant dense<0.000000e+00> : vector<1xf32>
    %29 = vector.multi_reduction <add>, %28, %cst_8 [1] : vector<1x128xf32> to vector<1xf32>
    %30 = vector.shape_cast %29 : vector<1xf32> to vector<1x1xf32>
    %31 = tpu.iota {dimensions = array<i32: 0>} : vector<8x128xi32>
    %32 = tpu.iota {dimensions = array<i32: 1>} : vector<8x128xi32>
    %c0_i32 = arith.constant 0 : i32
    %33 = vector.broadcast %c0_i32 : i32 to vector<8x128xi32>
    %34 = arith.cmpi eq, %31, %33 : vector<8x128xi32>
    %c0_i32_9 = arith.constant 0 : i32
    %35 = vector.broadcast %c0_i32_9 : i32 to vector<8x128xi32>
    %36 = arith.cmpi eq, %32, %35 : vector<8x128xi32>
    %37 = arith.andi %34, %36 : vector<8x128xi1>
    %38 = vector.shape_cast %30 : vector<1x1xf32> to vector<1x1xf32>
    %39 = vector.broadcast %38 : vector<1x1xf32> to vector<8x128xf32>
    %cst_10 = arith.constant 0.000000e+00 : f32
    %40 = vector.broadcast %cst_10 : f32 to vector<8x128xf32>
    %41 = arith.select %37, %39, %40 : vector<8x128xi1>, vector<8x128xf32>
    %c0_11 = arith.constant 0 : index
    %c0_12 = arith.constant 0 : index
    %42 = vector.load %arg3[%c0_11, %c0_12] : memref<8x128xf32, #tpu.memory_space<vmem>>, vector<8x128xf32>
    tpu.vector_store %arg3[%c0_11, %c0_12], %41 {strides = array<i32>} : memref<8x128xf32, #tpu.memory_space<vmem>>, vector<8x128xf32>,
    %cst_13 = arith.constant dense<0.000000e+00> : vector<128xf32>
    %43 = vector.multi_reduction <add>, %26, %cst_13 [0] : vector<32x128xf32> to vector<128xf32>
    %44 = vector.shape_cast %43 : vector<128xf32> to vector<1x128xf32>
    %cst_14 = arith.constant dense<0.000000e+00> : vector<1xf32>
    %45 = vector.multi_reduction <add>, %44, %cst_14 [1] : vector<1x128xf32> to vector<1xf32>
    %46 = vector.shape_cast %45 : vector<1xf32> to vector<1x1xf32>
    %47 = tpu.iota {dimensions = array<i32: 0>} : vector<8x128xi32>
    %48 = tpu.iota {dimensions = array<i32: 1>} : vector<8x128xi32>
    %c0_i32_15 = arith.constant 0 : i32
    %49 = vector.broadcast %c0_i32_15 : i32 to vector<8x128xi32>
    %50 = arith.cmpi eq, %47, %49 : vector<8x128xi32>
    %c0_i32_16 = arith.constant 0 : i32
    %51 = vector.broadcast %c0_i32_16 : i32 to vector<8x128xi32>
    %52 = arith.cmpi eq, %48, %51 : vector<8x128xi32>
    %53 = arith.andi %50, %52 : vector<8x128xi1>
    %54 = vector.shape_cast %46 : vector<1x1xf32> to vector<1x1xf32>
    %55 = vector.broadcast %54 : vector<1x1xf32> to vector<8x128xf32>
    %cst_17 = arith.constant 0.000000e+00 : f32
    %56 = vector.broadcast %cst_17 : f32 to vector<8x128xf32>
    %57 = arith.select %53, %55, %56 : vector<8x128xi1>, vector<8x128xf32>
    %c0_18 = arith.constant 0 : index
    %c0_19 = arith.constant 0 : index
    %58 = vector.load %arg4[%c0_18, %c0_19] : memref<8x128xf32, #tpu.memory_space<vmem>>, vector<8x128xf32>
    tpu.vector_store %arg4[%c0_18, %c0_19], %57 {strides = array<i32>} : memref<8x128xf32, #tpu.memory_space<vmem>>, vector<8x128xf32>,
    return
  }
  func.func @transform_0(%arg0: i32) -> (i32, i32) {
    %c0_i32 = arith.constant 0 : i32
    %c0_i32_0 = arith.constant 0 : i32
    return %arg0, %c0_i32 : i32, i32
  }
  func.func @transform_1(%arg0: i32) -> (i32, i32) {
    %c0_i32 = arith.constant 0 : i32
    %c0_i32_0 = arith.constant 0 : i32
    return %arg0, %c0_i32 : i32, i32
  }
  func.func @transform_2(%arg0: i32) -> (i32, i32) {
    %c0_i32 = arith.constant 0 : i32
    %c0_i32_0 = arith.constant 0 : i32
    return %arg0, %c0_i32 : i32, i32
  }
  func.func @transform_3(%arg0: i32) -> (i32, i32) {
    %c0_i32 = arith.constant 0 : i32
    %c0_i32_0 = arith.constant 0 : i32
    return %arg0, %c0_i32 : i32, i32
  }
}

</mosaic_0001>

<llo_original>
// kernel: tpu_custom_call.1
$region0: #{tpu_custom_call.1}
  #allocation0 [shape = 'u32[]', space=smem, size = 0x4, offset = 0x4, fixed_abs, tag = 'smem constant byte address 0x4 - core index']
  #allocation1 [shape = 'u32[144,128]{1,0:T(1,128)}', space=vmem, size = 0x12000, scoped, tag = 'internal scratch']
  %s0 = inlined_call_operand.hbm [shape: f32[32,128], index: 0, kind: input, shape index: {}]
  %s1 = inlined_call_operand.hbm [shape: f32[32,128], index: 1, kind: input, shape index: {}]
  %s2 = inlined_call_operand.hbm [shape: f32[8,128], index: 2, kind: output, shape index: {0}]
  %s3 = inlined_call_operand.hbm [shape: f32[8,128], index: 3, kind: output, shape index: {1}]
  %4 = xla_tuple %s2, %s3
  %s5 = sld [smem:[#allocation0]]
  $region34: #{tpu_custom_call.1} parent=0
    _
  %s7 = ssub.s32 1, %s5
  %s8 = scalar_select 0, %s7, %s5
  $region1: #{tpu_custom_call.1} parent=0
    #allocation2 [shape = 'u8[16384]{0}', space=vmem, size = 0x4000, scoped, tag = 'input window, operand 0, single buffered']
    #allocation3 [shape = 's32[1]{0}', space=sflag, size = 0x4, scoped, tag = 'scoped memory for tpu_custom_call.1']
    #allocation4 [shape = 's32[1]{0}', space=sflag, size = 0x4, scoped, tag = 'scoped memory for tpu_custom_call.1']
    #allocation5 [shape = 'u8[16384]{0}', space=vmem, size = 0x4000, scoped, tag = 'input window, operand 1, single buffered']
    #allocation6 [shape = 's32[1]{0}', space=sflag, size = 0x4, scoped, tag = 'scoped memory for tpu_custom_call.1']
    #allocation7 [shape = 'u8[4096]{0}', space=vmem, size = 0x1000, scoped, tag = 'output window, operand 0, single buffered']
    #allocation8 [shape = 'u8[4096]{0}', space=vmem, size = 0x1000, scoped, tag = 'output window, operand 1, single buffered']
    #allocation9 [shape = 's32[1]{0}', space=sflag, size = 0x4, scoped, tag = 'scoped memory for tpu_custom_call.1']
    %9 = vsyncpa [#allocation3], 0
    %10 = vsyncpa [#allocation6], 0
    %11 = vsyncpa [#allocation4], 0
    %12 = vsyncpa [#allocation9], 0
    // Predicated region
    $region2: #{tpu_custom_call.1} parent=1 // pred_check
      _
    $region3: #{tpu_custom_call.1} parent=1 // pred_check_branch
      %14 = sbr.rel (0) target = $region5
    $region4: #{tpu_custom_call.1} parent=1 // pred_region
      %s16 = ssub.s32 512, 512
      %17 = vsyncadd [#allocation3], %s16
      %s18 = sshll.u32 [#allocation2], 4
      %s19 = int_to_ptr.vmem [resolvable:$true] %s18
      %24 = dma.hbm_to_vmem [thread:$0]  %s0, 512, %s19, [#allocation3], 128, 128, 8
    $region5: #{tpu_custom_call.1} parent=1 // pred_fallthru
      _
    // Predicated region
    $region6: #{tpu_custom_call.1} parent=1 // pred_check
      _
    $region7: #{tpu_custom_call.1} parent=1 // pred_check_branch
      %26 = sbr.rel (0) target = $region9
    $region8: #{tpu_custom_call.1} parent=1 // pred_region
      %s28 = ssub.s32 512, 512
      %29 = vsyncadd [#allocation6], %s28
      %s30 = sshll.u32 [#allocation5], 4
      %s31 = int_to_ptr.vmem [resolvable:$true] %s30
      %36 = dma.hbm_to_vmem [thread:$0]  %s1, 512, %s31, [#allocation6], 128, 128, 8
    $region9: #{tpu_custom_call.1} parent=1 // pred_fallthru
      _
    // Predicated region
    $region10: #{tpu_custom_call.1} parent=1 // pred_check
      _
    $region11: #{tpu_custom_call.1} parent=1 // pred_check_branch
      %38 = sbr.rel (0) target = $region13
    $region12: #{tpu_custom_call.1} parent=1 // pred_region
      %39 = dma.done [#allocation3], 512
    $region13: #{tpu_custom_call.1} parent=1 // pred_fallthru
      _
    // Predicated region
    $region14: #{tpu_custom_call.1} parent=1 // pred_check
      _
    $region15: #{tpu_custom_call.1} parent=1 // pred_check_branch
      %41 = sbr.rel (0) target = $region17
    $region16: #{tpu_custom_call.1} parent=1 // pred_region
      %42 = dma.done [#allocation6], 512
    $region17: #{tpu_custom_call.1} parent=1 // pred_fallthru
      _
    %v43 = vld [vmem:[#allocation2] sm:$0xff]
    %v44 = vld [vmem:[#allocation2 + $0x8] sm:$0xff]
    %v45 = vld [vmem:[#allocation2 + $0x10] sm:$0xff]
    %v46 = vld [vmem:[#allocation2 + $0x18] sm:$0xff]
    %v47 = vld [vmem:[#allocation5] sm:$0xff]
    %v48 = vld [vmem:[#allocation5 + $0x8] sm:$0xff]
    %v49 = vld [vmem:[#allocation5 + $0x10] sm:$0xff]
    %v50 = vld [vmem:[#allocation5 + $0x18] sm:$0xff]
    %51 = vmax.xlane.f32.xlu0 %v43
    %v52 = vpop.xlane.xlu0 %51
    %53 = vmax.xlane.f32.xlu0 %v44
    %v54 = vpop.xlane.xlu0 %53
    %55 = vmax.xlane.f32.xlu0 %v45
    %v56 = vpop.xlane.xlu0 %55
    %57 = vmax.xlane.f32.xlu0 %v46
    %v58 = vpop.xlane.xlu0 %57
    %v59 = vsub.f32 %v43, %v52
    %v60 = vsub.f32 %v44, %v54
    %v61 = vsub.f32 %v45, %v56
    %v62 = vsub.f32 %v46, %v58
    %v63 = vmul.f32 %v59, 1.442695
    %v64 = vpow.pop %v63
    %v65 = vmul.f32 %v60, 1.442695
    %v66 = vpow.pop %v65
    %v67 = vmul.f32 %v61, 1.442695
    %v68 = vpow.pop %v67
    %v69 = vmul.f32 %v62, 1.442695
    %v70 = vpow.pop %v69
    %71 = vadd.xlane.f32.xlu0 %v64
    %v72 = vpop.xlane.xlu0 %71
    %73 = vadd.xlane.f32.xlu0 %v66
    %v74 = vpop.xlane.xlu0 %73
    %75 = vadd.xlane.f32.xlu0 %v68
    %v76 = vpop.xlane.xlu0 %75
    %77 = vadd.xlane.f32.xlu0 %v70
    %v78 = vpop.xlane.xlu0 %77
    %v79 = vrcp.pop %v72
    %v80 = vrcp.pop %v74
    %v81 = vrcp.pop %v76
    %v82 = vrcp.pop %v78
    %v83 = vmul.f32 %v64, %v79
    %v84 = vmul.f32 %v66, %v80
    %v85 = vmul.f32 %v68, %v81
    %v86 = vmul.f32 %v70, %v82
    %v87 = vlog2.pop %v72
    %v88 = vmul.f32 %v87, 0.6931472
    %v89 = vlog2.pop %v74
    %v90 = vmul.f32 %v89, 0.6931472
    %v91 = vlog2.pop %v76
    %v92 = vmul.f32 %v91, 0.6931472
    %v93 = vlog2.pop %v78
    %v94 = vmul.f32 %v93, 0.6931472
    %v95 = vsub.f32 %v59, %v88
    %v96 = vsub.f32 %v60, %v90
    %v97 = vsub.f32 %v61, %v92
    %v98 = vsub.f32 %v62, %v94
    %v99 = vmul.f32 %v47, %v95
    %v100 = vmul.f32 %v48, %v96
    %v101 = vmul.f32 %v49, %v97
    %v102 = vmul.f32 %v50, %v98
    %v103 = vadd.f32 %v83, %v47
    %v104 = vadd.f32 %v84, %v48
    %v105 = vadd.f32 %v85, %v49
    %v106 = vadd.f32 %v86, %v50
    %v107 = vmul.f32 %v83, %v47
    %v108 = vmul.f32 %v84, %v48
    %v109 = vmul.f32 %v85, %v49
    %v110 = vmul.f32 %v86, %v50
    %v111 = vmul.f32 %v107, 2.0
    %v112 = vmul.f32 %v108, 2.0
    %v113 = vmul.f32 %v109, 2.0
    %v114 = vmul.f32 %v110, 2.0
    %v115 = vsub.f32 %v103, %v111
    %v116 = vsub.f32 %v104, %v112
    %v117 = vsub.f32 %v105, %v113
    %v118 = vsub.f32 %v106, %v114
    %v119 = vmul.f32 %v47, 0.5
    %v120 = vmul.f32 %v48, 0.5
    %v121 = vmul.f32 %v49, 0.5
    %v122 = vmul.f32 %v50, 0.5
    %v123 = vsub.f32 0.75, %v119
    %v124 = vsub.f32 0.75, %v120
    %v125 = vsub.f32 0.75, %v121
    %v126 = vsub.f32 0.75, %v122
    %v127 = vmul.f32 %v115, %v115
    %v128 = vmul.f32 %v116, %v116
    %v129 = vmul.f32 %v117, %v117
    %v130 = vmul.f32 %v118, %v118
    %v131 = vmul.f32 %v123, %v127
    %v132 = vmul.f32 %v124, %v128
    %v133 = vmul.f32 %v125, %v129
    %v134 = vmul.f32 %v126, %v130
    %v135 = vadd.f32 %v99, %v100
    %v136 = vadd.f32 %v135, %v101
    %v137 = vadd.f32 %v136, %v102
    %v138 = vrot.slane %v137, 4
    %v139 = vadd.f32 %v137, %v138
    %v140 = vrot.slane %v139, 2
    %v141 = vadd.f32 %v139, %v140
    %v142 = vrot.slane %v141, 1
    %v143 = vadd.f32 %v141, %v142
    %144 = vadd.xlane.f32.xlu0 %v143
    %v145 = vpop.xlane.xlu0 %144
    %v146 = vlaneseq
    %v147 = vshrl.u32 %v146, 7
    %v148 = vlaneseq
    %v149 = vand.u32 %v148, 127
    %vm150 = vcmp.eq.s32.totalorder %v147, 0
    %vm151 = vcmp.eq.s32.totalorder %v149, 0
    %vm152 = vmand %vm150, %vm151
    %v153 = vsel %vm152, %v145, 0.0
    %154 = vst [vmem:[#allocation7] sm:$0xff] %v153
    %v155 = vadd.f32 %v131, %v132
    %v156 = vadd.f32 %v155, %v133
    %v157 = vadd.f32 %v156, %v134
    %v158 = vrot.slane %v157, 4
    %v159 = vadd.f32 %v157, %v158
    %v160 = vrot.slane %v159, 2
    %v161 = vadd.f32 %v159, %v160
    %v162 = vrot.slane %v161, 1
    %v163 = vadd.f32 %v161, %v162
    %164 = vadd.xlane.f32.xlu0 %v163
    %v165 = vpop.xlane.xlu0 %164
    %v166 = vsel %vm152, %v165, 0.0
    %167 = vst [vmem:[#allocation8] sm:$0xff] %v166
    // Predicated region
    $region18: #{tpu_custom_call.1} parent=1 // pred_check
      _
    $region19: #{tpu_custom_call.1} parent=1 // pred_check_branch
      %169 = sbr.rel (0) target = $region21
    $region20: #{tpu_custom_call.1} parent=1 // pred_region
      %s171 = ssub.s32 128, 128
      %172 = vsyncadd [#allocation4], %s171
      %s174 = sshll.u32 [#allocation7], 4
      %s175 = int_to_ptr.vmem [resolvable:$true] %s174
      %177 = dma.vmem_to_hbm [thread:$0]  %s175, 128, %s2, [#allocation4]
    $region21: #{tpu_custom_call.1} parent=1 // pred_fallthru
      _
    // Predicated region
    $region22: #{tpu_custom_call.1} parent=1 // pred_check
      _
    $region23: #{tpu_custom_call.1} parent=1 // pred_check_branch
      %179 = sbr.rel (0) target = $region25
    $region24: #{tpu_custom_call.1} parent=1 // pred_region
      %s181 = ssub.s32 128, 128
      %182 = vsyncadd [#allocation9], %s181
      %s184 = sshll.u32 [#allocation8], 4
      %s185 = int_to_ptr.vmem [resolvable:$true] %s184
      %187 = dma.vmem_to_hbm [thread:$0]  %s185, 128, %s3, [#allocation9]
    $region25: #{tpu_custom_call.1} parent=1 // pred_fallthru
      _
    // Predicated region
    $region26: #{tpu_custom_call.1} parent=1 // pred_check
      _
    $region27: #{tpu_custom_call.1} parent=1 // pred_check_branch
      %189 = sbr.rel (0) target = $region29
    $region28: #{tpu_custom_call.1} parent=1 // pred_region
      %190 = dma.done [#allocation4], 128
    $region29: #{tpu_custom_call.1} parent=1 // pred_fallthru
      _
    // Predicated region
    $region30: #{tpu_custom_call.1} parent=1 // pred_check
      _
    $region31: #{tpu_custom_call.1} parent=1 // pred_check_branch
      %192 = sbr.rel (0) target = $region33
    $region32: #{tpu_custom_call.1} parent=1 // pred_region
      %193 = dma.done [#allocation9], 128
    $region33: #{tpu_custom_call.1} parent=1 // pred_fallthru
      _
    %194 = vsyncpa [#allocation3], 1
    %195 = vsyncpa [#allocation6], 1
    %196 = vsyncpa [#allocation4], 1
    %197 = vsyncpa [#allocation9], 1

</llo_original>
